<compile_context>
chip_gen: v6e
topology: v6e:2x2x1
jax: 0.10.0
libtpu: 0.0.40
codegen_flags: <defaults>
</compile_context>

<pallas_src>
import functools

import jax
import jax.numpy as jnp
from jax.experimental import pallas as pl
from jax.experimental.pallas import tpu as pltpu

BN_EPS = 1e-5
LANE = 128
SUBLANE_BF16 = 16  # bf16 packs two rows per sublane -> 16-row-aligned tiles


def _round_up(x, m):
    return (x + m - 1) // m * m


@functools.lru_cache(maxsize=None)
def _vmem_limit_bytes():
    """~3/4 of physical VMEM (96 MiB on v5e/v6e, 48 MiB on v7x), capped."""
    try:
        cap = pltpu.get_tpu_info().vmem_capacity_bytes
    except Exception:
        cap = 128 * 1024 * 1024
    return int(min(cap * 3 // 4, 96 * 1024 * 1024))


def _const_spec(block_shape, single_buffer):
    """BlockSpec for a grid-invariant (weight / bias / scale) block."""
    if single_buffer:
        return pl.BlockSpec(block_shape, lambda i: (0, 0),
                            pipeline_mode=pl.Buffered(1))
    return pl.BlockSpec(block_shape, lambda i: (0, 0))


# --------------------------------------------------------------------------
# Phase 1: h = x @ W1 (bf16 MXU inputs, f32 accumulation), h stored as bf16,
# plus per-tile batch sum / sum-of-squares partials (f32, computed *before*
# the bf16 downcast). Every output varies with the grid index -> "parallel".
# --------------------------------------------------------------------------
def _matmul_stats_kernel(x_ref, w1_ref, h_ref, sum_ref, ssq_ref):
    # x is f32 in HBM; cast to bf16 in-register (VPU work hidden under MXU).
    h = jnp.dot(x_ref[...].astype(jnp.bfloat16), w1_ref[...],
                preferred_element_type=jnp.float32)
    # f32 statistics before the downcast so mean/var stay accurate.
    sum_ref[...] = jnp.sum(h, axis=0, keepdims=True)
    ssq_ref[...] = jnp.sum(h * h, axis=0, keepdims=True)
    h_ref[...] = h.astype(h_ref.dtype)


# --------------------------------------------------------------------------
# Phase 2: folded BN (h*scale + shift) -> ReLU -> h @ W2 + b2.
# Fully independent per batch tile -> "parallel" grid axis.
# --------------------------------------------------------------------------
def _bn_relu_matmul_kernel(h_ref, scale_ref, shift_ref, w2_ref, b2_ref, o_ref):
    h = h_ref[...].astype(jnp.float32)  # bf16 -> f32 for the affine (v5e-safe)
    h = jnp.maximum(h * scale_ref[...] + shift_ref[...], 0.0)
    o_ref[...] = (
        jnp.dot(h.astype(jnp.bfloat16), w2_ref[...],
                preferred_element_type=jnp.float32)
        + b2_ref[...]
    )


@functools.partial(jax.jit, static_argnames=("block_n", "single_buffer_weights"))
def mlp_forward(x, w1, b1, gamma, beta, w2, b2, *, block_n=1024,
                single_buffer_weights=True):
    """x: (N, nfeat) f32. Weights stored pre-transposed: w1 (nfeat, nhid),
    w2 (nhid, nclass). Returns (N, nclass) f32.

    b1 is accepted for interface parity with nn.Linear but is not used: with
    training-mode BatchNorm right after layer1, the bias cancels exactly.
    """
    del b1  # exactly cancelled by BN mean subtraction (use_bn=True path)
    # TODO(synk): use_bn=False / eval-mode (running-stats) BN paths, where b1
    # matters, are not implemented; this covers the default use_bn=True forward.

    n, nfeat = x.shape
    nhid = w1.shape[1]
    nclass = w2.shape[1]
    nfeat_p = _round_up(nfeat, LANE)
    nhid_p = _round_up(nhid, LANE)
    ncls_p = _round_up(nclass, LANE)

    # Batch tile: multiple of 16 (bf16 sublane packing); block_n is a multiple
    # of 256 so large batches fill the MXU M dimension on v6e/v7x.
    tn = min(block_n, _round_up(n, SUBLANE_BF16))
    n_pad = _round_up(n, tn)
    n_tiles = n_pad // tn
    grid = (n_tiles,)

    # x stays f32 (cast to bf16 in-kernel); pads are no-ops when already aligned.
    x_p = jnp.pad(x, ((0, n_pad - n), (0, nfeat_p - nfeat)))
    w1_p = jnp.pad(w1, ((0, nfeat_p - nfeat), (0, nhid_p - nhid))).astype(jnp.bfloat16)
    gamma_p = jnp.pad(gamma, ((0, 0), (0, nhid_p - nhid)))
    beta_p = jnp.pad(beta, ((0, 0), (0, nhid_p - nhid)))
    w2_p = jnp.pad(w2, ((0, nhid_p - nhid), (0, ncls_p - nclass))).astype(jnp.bfloat16)
    b2_p = jnp.pad(b2, ((0, 0), (0, ncls_p - nclass)))

    vmem_limit = _vmem_limit_bytes()

    # ---- Phase 1: first matmul + per-tile batch statistics ------------------
    h, part_sum, part_ssq = pl.pallas_call(
        _matmul_stats_kernel,
        grid=grid,
        in_specs=[
            pl.BlockSpec((tn, nfeat_p), lambda i: (i, 0)),
            _const_spec((nfeat_p, nhid_p), single_buffer_weights),
        ],
        out_specs=[
            pl.BlockSpec((tn, nhid_p), lambda i: (i, 0)),
            pl.BlockSpec((1, nhid_p), lambda i: (i, 0)),
            pl.BlockSpec((1, nhid_p), lambda i: (i, 0)),
        ],
        out_shape=[
            jax.ShapeDtypeStruct((n_pad, nhid_p), jnp.bfloat16),
            jax.ShapeDtypeStruct((n_tiles, nhid_p), jnp.float32),
            jax.ShapeDtypeStruct((n_tiles, nhid_p), jnp.float32),
        ],
        compiler_params=pltpu.CompilerParams(
            dimension_semantics=("parallel",),
            vmem_limit_bytes=vmem_limit,
        ),
    )(x_p, w1_p)

    # ---- Fold BN into (scale, shift): tiny (n_tiles, nhid_p) XLA reduction --
    # Padded batch rows are all-zero (no b1) and contribute nothing to the
    # sums; divide by the real batch size n. Padded hidden columns stay zero.
    stat_sum = jnp.sum(part_sum, axis=0, keepdims=True)
    stat_ssq = jnp.sum(part_ssq, axis=0, keepdims=True)
    mean = stat_sum * (1.0 / n)
    var = jnp.maximum(stat_ssq * (1.0 / n) - mean * mean, 0.0)
    scale = gamma_p * jax.lax.rsqrt(var + BN_EPS)
    shift = beta_p - mean * scale

    # ---- Phase 2: normalize + ReLU + second matmul ---------------------------
    out_p = pl.pallas_call(
        _bn_relu_matmul_kernel,
        grid=grid,
        in_specs=[
            pl.BlockSpec((tn, nhid_p), lambda i: (i, 0)),
            _const_spec((1, nhid_p), single_buffer_weights),
            _const_spec((1, nhid_p), single_buffer_weights),
            _const_spec((nhid_p, ncls_p), single_buffer_weights),
            _const_spec((1, ncls_p), single_buffer_weights),
        ],
        out_specs=pl.BlockSpec((tn, ncls_p), lambda i: (i, 0)),
        out_shape=jax.ShapeDtypeStruct((n_pad, ncls_p), jnp.float32),
        compiler_params=pltpu.CompilerParams(
            dimension_semantics=("parallel",),
            vmem_limit_bytes=vmem_limit,
        ),
    )(h, scale, shift, w2_p, b2_p)

    return out_p[:n, :nclass]


# --------------------------------------------------------------------------
# Parameter init (mimics nn.Linear / nn.BatchNorm1d shapes) and references.
# --------------------------------------------------------------------------
def init_params(key, nfeat, nhid, nclass):
    k1, k2, k3, k4, k5, k6 = jax.random.split(key, 6)
    lim1 = 1.0 / jnp.sqrt(nfeat)
    w1 = jax.random.uniform(k1, (nfeat, nhid), jnp.float32, -lim1, lim1)
    b1 = jax.random.uniform(k2, (1, nhid), jnp.float32, -lim1, lim1)
    # BatchNorm1d affine (perturbed from the 1/0 defaults to exercise the fold).
    gamma = 1.0 + 0.1 * jax.random.normal(k5, (1, nhid), jnp.float32)
    beta = 0.1 * jax.random.normal(k6, (1, nhid), jnp.float32)
    lim2 = 1.0 / jnp.sqrt(nhid)
    w2 = jax.random.uniform(k3, (nhid, nclass), jnp.float32, -lim2, lim2)
    b2 = jax.random.uniform(k4, (1, nclass), jnp.float32, -lim2, lim2)
    return w1, b1, gamma, beta, w2, b2


def mlp_reference(x, w1, b1, gamma, beta, w2, b2):
    """Faithful f32 reference of the PyTorch module (training-mode BN)."""
    hp = jax.lax.Precision.HIGHEST
    h = jnp.dot(x, w1, precision=hp, preferred_element_type=jnp.float32) + b1
    mean = jnp.mean(h, axis=0, keepdims=True)
    var = jnp.mean((h - mean) ** 2, axis=0, keepdims=True)
    h = (h - mean) * jax.lax.rsqrt(var + BN_EPS) * gamma + beta
    h = jnp.maximum(h, 0.0)
    return jnp.dot(h, w2, precision=hp, preferred_element_type=jnp.float32) + b2


def mlp_reference_matched(x, w1, b1, gamma, beta, w2, b2):
    """Reference matching kernel numerics: bf16 MXU inputs / f32 accumulation,
    f32 statistics, bf16 h storage, folded BN affine, b1 dropped (exact under
    training-mode BN)."""
    del b1
    h = jnp.dot(x.astype(jnp.bfloat16), w1.astype(jnp.bfloat16),
                preferred_element_type=jnp.float32)
    mean = jnp.mean(h, axis=0, keepdims=True)
    var = jnp.mean((h - mean) ** 2, axis=0, keepdims=True)
    scale = gamma * jax.lax.rsqrt(var + BN_EPS)
    shift = beta - mean * scale
    hq = h.astype(jnp.bfloat16).astype(jnp.float32)  # h storage round-trip
    hn = jnp.maximum(hq * scale + shift, 0.0)
    return jnp.dot(hn.astype(jnp.bfloat16), w2.astype(jnp.bfloat16),
                   preferred_element_type=jnp.float32) + b2


if __name__ == "__main__":
    nfeat, nhid, nclass, batch = 32, 64, 16, 8

    key = jax.random.PRNGKey(0)
    kx, kp = jax.random.split(key)
    x = jax.random.normal(kx, (batch, nfeat), jnp.float32)
    params = init_params(kp, nfeat, nhid, nclass)

    try:
        out = jax.block_until_ready(mlp_forward(x, *params))
    except Exception:
        # Fallback if this JAX build rejects pl.Buffered(1) single-buffering
        # of grid-invariant blocks; everything else stays identical.
        out = jax.block_until_ready(
            mlp_forward(x, *params, single_buffer_weights=False))

    ref_matched = mlp_reference_matched(x, *params)  # kernel-equivalent numerics
    ref_f32 = mlp_reference(x, *params)              # faithful f32 module math

    assert out.shape == (batch, nclass)
    assert jnp.allclose(out, ref_matched, atol=5e-3, rtol=5e-3), \
        "mismatch vs bf16-matched reference"
    assert jnp.allclose(out, ref_f32, atol=1e-1, rtol=1e-1), \
        "mismatch vs f32 reference"

    print("KERNEL_OK")
</pallas_src>

<mosaic_0001>
module attributes {stable_mosaic.version = 11 : i64} {
  func.func @_matmul_stats_kernel(%arg0: i32, %arg1: memref<16x128xf32, #tpu.memory_space<vmem>>, %arg2: memref<128x128xbf16, #tpu.memory_space<vmem>>, %arg3: memref<16x128xbf16, #tpu.memory_space<vmem>>, %arg4: memref<1x128xf32, #tpu.memory_space<vmem>>, %arg5: memref<1x128xf32, #tpu.memory_space<vmem>>) attributes {dimension_semantics = [#tpu.dimension_semantics<parallel>], iteration_bounds = array<i64: 1>, scalar_prefetch = 0 : i64, scratch_operands = 0 : i64, tpu.core_type = #tpu.core_type<tc>, window_params = [{transform_indices = @transform_0, window_bounds = array<i64: 16, 128>}, {pipeline_mode = #tpu.pipeline_mode<synchronous>, transform_indices = @transform_1, window_bounds = array<i64: 128, 128>}, {transform_indices = @transform_2, window_bounds = array<i64: 16, 128>}, {transform_indices = @transform_3, window_bounds = array<i64: 1, 128>}, {transform_indices = @transform_4, window_bounds = array<i64: 1, 128>}]} {
    %c0 = arith.constant 0 : index
    %c0_0 = arith.constant 0 : index
    %0 = vector.load %arg1[%c0, %c0_0] : memref<16x128xf32, #tpu.memory_space<vmem>>, vector<16x128xf32>
    %1 = arith.truncf %0 : vector<16x128xf32> to vector<16x128xbf16>
    %c0_1 = arith.constant 0 : index
    %c0_2 = arith.constant 0 : index
    %2 = vector.load %arg2[%c0_1, %c0_2] : memref<128x128xbf16, #tpu.memory_space<vmem>>, vector<128x128xbf16>
    %cst = arith.constant dense<0.000000e+00> : vector<16x128xf32>
    %3 = tpu.matmul %1, %2, %cst {dimension_numbers = #tpu.dot_dimension_numbers<[1], [0], [0], [1], [0, 0, 1, 1], [], []>} : vector<16x128xbf16>, vector<128x128xbf16>, vector<16x128xf32> -> vector<16x128xf32>
    %cst_3 = arith.constant dense<0.000000e+00> : vector<128xf32>
    %4 = vector.multi_reduction <add>, %3, %cst_3 [0] : vector<16x128xf32> to vector<128xf32>
    %5 = vector.shape_cast %4 : vector<128xf32> to vector<1x128xf32>
    %c0_4 = arith.constant 0 : index
    %c0_5 = arith.constant 0 : index
    %6 = vector.load %arg4[%c0_4, %c0_5] : memref<1x128xf32, #tpu.memory_space<vmem>>, vector<1x128xf32>
    tpu.vector_store %arg4[%c0_4, %c0_5], %5 {strides = array<i32>} : memref<1x128xf32, #tpu.memory_space<vmem>>, vector<1x128xf32>,
    %7 = arith.mulf %3, %3 : vector<16x128xf32>
    %cst_6 = arith.constant dense<0.000000e+00> : vector<128xf32>
    %8 = vector.multi_reduction <add>, %7, %cst_6 [0] : vector<16x128xf32> to vector<128xf32>
    %9 = vector.shape_cast %8 : vector<128xf32> to vector<1x128xf32>
    %c0_7 = arith.constant 0 : index
    %c0_8 = arith.constant 0 : index
    %10 = vector.load %arg5[%c0_7, %c0_8] : memref<1x128xf32, #tpu.memory_space<vmem>>, vector<1x128xf32>
    tpu.vector_store %arg5[%c0_7, %c0_8], %9 {strides = array<i32>} : memref<1x128xf32, #tpu.memory_space<vmem>>, vector<1x128xf32>,
    %11 = arith.truncf %3 : vector<16x128xf32> to vector<16x128xbf16>
    %c0_9 = arith.constant 0 : index
    %c0_10 = arith.constant 0 : index
    %12 = vector.load %arg3[%c0_9, %c0_10] : memref<16x128xbf16, #tpu.memory_space<vmem>>, vector<16x128xbf16>
    tpu.vector_store %arg3[%c0_9, %c0_10], %11 {strides = array<i32>} : memref<16x128xbf16, #tpu.memory_space<vmem>>, vector<16x128xbf16>,
    return
  }
  func.func @transform_0(%arg0: i32) -> (i32, i32) {
    %c0_i32 = arith.constant 0 : i32
    %c0_i32_0 = arith.constant 0 : i32
    return %arg0, %c0_i32 : i32, i32
  }
  func.func @transform_1(%arg0: i32) -> (i32, i32) {
    %c0_i32 = arith.constant 0 : i32
    %c0_i32_0 = arith.constant 0 : i32
    %c0_i32_1 = arith.constant 0 : i32
    return %c0_i32, %c0_i32_0 : i32, i32
  }
  func.func @transform_2(%arg0: i32) -> (i32, i32) {
    %c0_i32 = arith.constant 0 : i32
    %c0_i32_0 = arith.constant 0 : i32
    return %arg0, %c0_i32 : i32, i32
  }
  func.func @transform_3(%arg0: i32) -> (i32, i32) {
    %c0_i32 = arith.constant 0 : i32
    %c0_i32_0 = arith.constant 0 : i32
    return %arg0, %c0_i32 : i32, i32
  }
  func.func @transform_4(%arg0: i32) -> (i32, i32) {
    %c0_i32 = arith.constant 0 : i32
    %c0_i32_0 = arith.constant 0 : i32
    return %arg0, %c0_i32 : i32, i32
  }
}

module attributes {stable_mosaic.version = 11 : i64} {
  func.func @_bn_relu_matmul_kernel(%arg0: i32, %arg1: memref<16x128xbf16, #tpu.memory_space<vmem>>, %arg2: memref<1x128xf32, #tpu.memory_space<vmem>>, %arg3: memref<1x128xf32, #tpu.memory_space<vmem>>, %arg4: memref<128x128xbf16, #tpu.memory_space<vmem>>, %arg5: memref<1x128xf32, #tpu.memory_space<vmem>>, %arg6: memref<16x128xf32, #tpu.memory_space<vmem>>) attributes {dimension_semantics = [#tpu.dimension_semantics<parallel>], iteration_bounds = array<i64: 1>, scalar_prefetch = 0 : i64, scratch_operands = 0 : i64, tpu.core_type = #tpu.core_type<tc>, window_params = [{transform_indices = @transform_0, window_bounds = array<i64: 16, 128>}, {pipeline_mode = #tpu.pipeline_mode<synchronous>, transform_indices = @transform_1, window_bounds = array<i64: 1, 128>}, {pipeline_mode = #tpu.pipeline_mode<synchronous>, transform_indices = @transform_2, window_bounds = array<i64: 1, 128>}, {pipeline_mode = #tpu.pipeline_mode<synchronous>, transform_indices = @transform_3, window_bounds = array<i64: 128, 128>}, {pipeline_mode = #tpu.pipeline_mode<synchronous>, transform_indices = @transform_4, window_bounds = array<i64: 1, 128>}, {transform_indices = @transform_5, window_bounds = array<i64: 16, 128>}]} {
    %c0 = arith.constant 0 : index
    %c0_0 = arith.constant 0 : index
    %0 = vector.load %arg1[%c0, %c0_0] : memref<16x128xbf16, #tpu.memory_space<vmem>>, vector<16x128xbf16>
    %1 = arith.extf %0 : vector<16x128xbf16> to vector<16x128xf32>
    %c0_1 = arith.constant 0 : index
    %c0_2 = arith.constant 0 : index
    %2 = vector.load %arg2[%c0_1, %c0_2] : memref<1x128xf32, #tpu.memory_space<vmem>>, vector<1x128xf32>
    %3 = vector.broadcast %2 : vector<1x128xf32> to vector<16x128xf32>
    %4 = arith.mulf %1, %3 : vector<16x128xf32>
    %c0_3 = arith.constant 0 : index
    %c0_4 = arith.constant 0 : index
    %5 = vector.load %arg3[%c0_3, %c0_4] : memref<1x128xf32, #tpu.memory_space<vmem>>, vector<1x128xf32>
    %6 = vector.broadcast %5 : vector<1x128xf32> to vector<16x128xf32>
    %7 = arith.addf %4, %6 : vector<16x128xf32>
    %cst = arith.constant 0.000000e+00 : f32
    %8 = vector.broadcast %cst : f32 to vector<16x128xf32>
    %9 = arith.maximumf %7, %8 : vector<16x128xf32>
    %10 = arith.truncf %9 : vector<16x128xf32> to vector<16x128xbf16>
    %c0_5 = arith.constant 0 : index
    %c0_6 = arith.constant 0 : index
    %11 = vector.load %arg4[%c0_5, %c0_6] : memref<128x128xbf16, #tpu.memory_space<vmem>>, vector<128x128xbf16>
    %cst_7 = arith.constant dense<0.000000e+00> : vector<16x128xf32>
    %12 = tpu.matmul %10, %11, %cst_7 {dimension_numbers = #tpu.dot_dimension_numbers<[1], [0], [0], [1], [0, 0, 1, 1], [], []>} : vector<16x128xbf16>, vector<128x128xbf16>, vector<16x128xf32> -> vector<16x128xf32>
    %c0_8 = arith.constant 0 : index
    %c0_9 = arith.constant 0 : index
    %13 = vector.load %arg5[%c0_8, %c0_9] : memref<1x128xf32, #tpu.memory_space<vmem>>, vector<1x128xf32>
    %14 = vector.broadcast %13 : vector<1x128xf32> to vector<16x128xf32>
    %15 = arith.addf %12, %14 : vector<16x128xf32>
    %c0_10 = arith.constant 0 : index
    %c0_11 = arith.constant 0 : index
    %16 = vector.load %arg6[%c0_10, %c0_11] : memref<16x128xf32, #tpu.memory_space<vmem>>, vector<16x128xf32>
    tpu.vector_store %arg6[%c0_10, %c0_11], %15 {strides = array<i32>} : memref<16x128xf32, #tpu.memory_space<vmem>>, vector<16x128xf32>,
    return
  }
  func.func @transform_0(%arg0: i32) -> (i32, i32) {
    %c0_i32 = arith.constant 0 : i32
    %c0_i32_0 = arith.constant 0 : i32
    return %arg0, %c0_i32 : i32, i32
  }
  func.func @transform_1(%arg0: i32) -> (i32, i32) {
    %c0_i32 = arith.constant 0 : i32
    %c0_i32_0 = arith.constant 0 : i32
    %c0_i32_1 = arith.constant 0 : i32
    return %c0_i32, %c0_i32_0 : i32, i32
  }
  func.func @transform_2(%arg0: i32) -> (i32, i32) {
    %c0_i32 = arith.constant 0 : i32
    %c0_i32_0 = arith.constant 0 : i32
    %c0_i32_1 = arith.constant 0 : i32
    return %c0_i32, %c0_i32_0 : i32, i32
  }
  func.func @transform_3(%arg0: i32) -> (i32, i32) {
    %c0_i32 = arith.constant 0 : i32
    %c0_i32_0 = arith.constant 0 : i32
    %c0_i32_1 = arith.constant 0 : i32
    return %c0_i32, %c0_i32_0 : i32, i32
  }
  func.func @transform_4(%arg0: i32) -> (i32, i32) {
    %c0_i32 = arith.constant 0 : i32
    %c0_i32_0 = arith.constant 0 : i32
    %c0_i32_1 = arith.constant 0 : i32
    return %c0_i32, %c0_i32_0 : i32, i32
  }
  func.func @transform_5(%arg0: i32) -> (i32, i32) {
    %c0_i32 = arith.constant 0 : i32
    %c0_i32_0 = arith.constant 0 : i32
    return %arg0, %c0_i32 : i32, i32
  }
}

module attributes {stable_mosaic.version = 11 : i64} {
  func.func @_matmul_stats_kernel(%arg0: i32, %arg1: memref<16x128xf32, #tpu.memory_space<vmem>>, %arg2: memref<128x128xbf16, #tpu.memory_space<vmem>>, %arg3: memref<16x128xbf16, #tpu.memory_space<vmem>>, %arg4: memref<1x128xf32, #tpu.memory_space<vmem>>, %arg5: memref<1x128xf32, #tpu.memory_space<vmem>>) attributes {dimension_semantics = [#tpu.dimension_semantics<parallel>], iteration_bounds = array<i64: 1>, scalar_prefetch = 0 : i64, scratch_operands = 0 : i64, tpu.core_type = #tpu.core_type<tc>, window_params = [{transform_indices = @transform_0, window_bounds = array<i64: 16, 128>}, {pipeline_mode = #tpu.pipeline_mode<synchronous>, transform_indices = @transform_1, window_bounds = array<i64: 128, 128>}, {transform_indices = @transform_2, window_bounds = array<i64: 16, 128>}, {transform_indices = @transform_3, window_bounds = array<i64: 1, 128>}, {transform_indices = @transform_4, window_bounds = array<i64: 1, 128>}]} {
    %c0 = arith.constant 0 : index
    %c0_0 = arith.constant 0 : index
    %0 = vector.load %arg1[%c0, %c0_0] : memref<16x128xf32, #tpu.memory_space<vmem>>, vector<16x128xf32>
    %1 = arith.truncf %0 : vector<16x128xf32> to vector<16x128xbf16>
    %c0_1 = arith.constant 0 : index
    %c0_2 = arith.constant 0 : index
    %2 = vector.load %arg2[%c0_1, %c0_2] : memref<128x128xbf16, #tpu.memory_space<vmem>>, vector<128x128xbf16>
    %cst = arith.constant dense<0.000000e+00> : vector<16x128xf32>
    %3 = tpu.matmul %1, %2, %cst {dimension_numbers = #tpu.dot_dimension_numbers<[1], [0], [0], [1], [0, 0, 1, 1], [], []>} : vector<16x128xbf16>, vector<128x128xbf16>, vector<16x128xf32> -> vector<16x128xf32>
    %cst_3 = arith.constant dense<0.000000e+00> : vector<128xf32>
    %4 = vector.multi_reduction <add>, %3, %cst_3 [0] : vector<16x128xf32> to vector<128xf32>
    %5 = vector.shape_cast %4 : vector<128xf32> to vector<1x128xf32>
    %c0_4 = arith.constant 0 : index
    %c0_5 = arith.constant 0 : index
    %6 = vector.load %arg4[%c0_4, %c0_5] : memref<1x128xf32, #tpu.memory_space<vmem>>, vector<1x128xf32>
    tpu.vector_store %arg4[%c0_4, %c0_5], %5 {strides = array<i32>} : memref<1x128xf32, #tpu.memory_space<vmem>>, vector<1x128xf32>,
    %7 = arith.mulf %3, %3 : vector<16x128xf32>
    %cst_6 = arith.constant dense<0.000000e+00> : vector<128xf32>
    %8 = vector.multi_reduction <add>, %7, %cst_6 [0] : vector<16x128xf32> to vector<128xf32>
    %9 = vector.shape_cast %8 : vector<128xf32> to vector<1x128xf32>
    %c0_7 = arith.constant 0 : index
    %c0_8 = arith.constant 0 : index
    %10 = vector.load %arg5[%c0_7, %c0_8] : memref<1x128xf32, #tpu.memory_space<vmem>>, vector<1x128xf32>
    tpu.vector_store %arg5[%c0_7, %c0_8], %9 {strides = array<i32>} : memref<1x128xf32, #tpu.memory_space<vmem>>, vector<1x128xf32>,
    %11 = arith.truncf %3 : vector<16x128xf32> to vector<16x128xbf16>
    %c0_9 = arith.constant 0 : index
    %c0_10 = arith.constant 0 : index
    %12 = vector.load %arg3[%c0_9, %c0_10] : memref<16x128xbf16, #tpu.memory_space<vmem>>, vector<16x128xbf16>
    tpu.vector_store %arg3[%c0_9, %c0_10], %11 {strides = array<i32>} : memref<16x128xbf16, #tpu.memory_space<vmem>>, vector<16x128xbf16>,
    return
  }
  func.func @transform_0(%arg0: i32) -> (i32, i32) {
    %c0_i32 = arith.constant 0 : i32
    %c0_i32_0 = arith.constant 0 : i32
    return %arg0, %c0_i32 : i32, i32
  }
  func.func @transform_1(%arg0: i32) -> (i32, i32) {
    %c0_i32 = arith.constant 0 : i32
    %c0_i32_0 = arith.constant 0 : i32
    %c0_i32_1 = arith.constant 0 : i32
    return %c0_i32, %c0_i32_0 : i32, i32
  }
  func.func @transform_2(%arg0: i32) -> (i32, i32) {
    %c0_i32 = arith.constant 0 : i32
    %c0_i32_0 = arith.constant 0 : i32
    return %arg0, %c0_i32 : i32, i32
  }
  func.func @transform_3(%arg0: i32) -> (i32, i32) {
    %c0_i32 = arith.constant 0 : i32
    %c0_i32_0 = arith.constant 0 : i32
    return %arg0, %c0_i32 : i32, i32
  }
  func.func @transform_4(%arg0: i32) -> (i32, i32) {
    %c0_i32 = arith.constant 0 : i32
    %c0_i32_0 = arith.constant 0 : i32
    return %arg0, %c0_i32 : i32, i32
  }
}

module attributes {stable_mosaic.version = 11 : i64} {
  func.func @_bn_relu_matmul_kernel(%arg0: i32, %arg1: memref<16x128xbf16, #tpu.memory_space<vmem>>, %arg2: memref<1x128xf32, #tpu.memory_space<vmem>>, %arg3: memref<1x128xf32, #tpu.memory_space<vmem>>, %arg4: memref<128x128xbf16, #tpu.memory_space<vmem>>, %arg5: memref<1x128xf32, #tpu.memory_space<vmem>>, %arg6: memref<16x128xf32, #tpu.memory_space<vmem>>) attributes {dimension_semantics = [#tpu.dimension_semantics<parallel>], iteration_bounds = array<i64: 1>, scalar_prefetch = 0 : i64, scratch_operands = 0 : i64, tpu.core_type = #tpu.core_type<tc>, window_params = [{transform_indices = @transform_0, window_bounds = array<i64: 16, 128>}, {pipeline_mode = #tpu.pipeline_mode<synchronous>, transform_indices = @transform_1, window_bounds = array<i64: 1, 128>}, {pipeline_mode = #tpu.pipeline_mode<synchronous>, transform_indices = @transform_2, window_bounds = array<i64: 1, 128>}, {pipeline_mode = #tpu.pipeline_mode<synchronous>, transform_indices = @transform_3, window_bounds = array<i64: 128, 128>}, {pipeline_mode = #tpu.pipeline_mode<synchronous>, transform_indices = @transform_4, window_bounds = array<i64: 1, 128>}, {transform_indices = @transform_5, window_bounds = array<i64: 16, 128>}]} {
    %c0 = arith.constant 0 : index
    %c0_0 = arith.constant 0 : index
    %0 = vector.load %arg1[%c0, %c0_0] : memref<16x128xbf16, #tpu.memory_space<vmem>>, vector<16x128xbf16>
    %1 = arith.extf %0 : vector<16x128xbf16> to vector<16x128xf32>
    %c0_1 = arith.constant 0 : index
    %c0_2 = arith.constant 0 : index
    %2 = vector.load %arg2[%c0_1, %c0_2] : memref<1x128xf32, #tpu.memory_space<vmem>>, vector<1x128xf32>
    %3 = vector.broadcast %2 : vector<1x128xf32> to vector<16x128xf32>
    %4 = arith.mulf %1, %3 : vector<16x128xf32>
    %c0_3 = arith.constant 0 : index
    %c0_4 = arith.constant 0 : index
    %5 = vector.load %arg3[%c0_3, %c0_4] : memref<1x128xf32, #tpu.memory_space<vmem>>, vector<1x128xf32>
    %6 = vector.broadcast %5 : vector<1x128xf32> to vector<16x128xf32>
    %7 = arith.addf %4, %6 : vector<16x128xf32>
    %cst = arith.constant 0.000000e+00 : f32
    %8 = vector.broadcast %cst : f32 to vector<16x128xf32>
    %9 = arith.maximumf %7, %8 : vector<16x128xf32>
    %10 = arith.truncf %9 : vector<16x128xf32> to vector<16x128xbf16>
    %c0_5 = arith.constant 0 : index
    %c0_6 = arith.constant 0 : index
    %11 = vector.load %arg4[%c0_5, %c0_6] : memref<128x128xbf16, #tpu.memory_space<vmem>>, vector<128x128xbf16>
    %cst_7 = arith.constant dense<0.000000e+00> : vector<16x128xf32>
    %12 = tpu.matmul %10, %11, %cst_7 {dimension_numbers = #tpu.dot_dimension_numbers<[1], [0], [0], [1], [0, 0, 1, 1], [], []>} : vector<16x128xbf16>, vector<128x128xbf16>, vector<16x128xf32> -> vector<16x128xf32>
    %c0_8 = arith.constant 0 : index
    %c0_9 = arith.constant 0 : index
    %13 = vector.load %arg5[%c0_8, %c0_9] : memref<1x128xf32, #tpu.memory_space<vmem>>, vector<1x128xf32>
    %14 = vector.broadcast %13 : vector<1x128xf32> to vector<16x128xf32>
    %15 = arith.addf %12, %14 : vector<16x128xf32>
    %c0_10 = arith.constant 0 : index
    %c0_11 = arith.constant 0 : index
    %16 = vector.load %arg6[%c0_10, %c0_11] : memref<16x128xf32, #tpu.memory_space<vmem>>, vector<16x128xf32>
    tpu.vector_store %arg6[%c0_10, %c0_11], %15 {strides = array<i32>} : memref<16x128xf32, #tpu.memory_space<vmem>>, vector<16x128xf32>,
    return
  }
  func.func @transform_0(%arg0: i32) -> (i32, i32) {
    %c0_i32 = arith.constant 0 : i32
    %c0_i32_0 = arith.constant 0 : i32
    return %arg0, %c0_i32 : i32, i32
  }
  func.func @transform_1(%arg0: i32) -> (i32, i32) {
    %c0_i32 = arith.constant 0 : i32
    %c0_i32_0 = arith.constant 0 : i32
    %c0_i32_1 = arith.constant 0 : i32
    return %c0_i32, %c0_i32_0 : i32, i32
  }
  func.func @transform_2(%arg0: i32) -> (i32, i32) {
    %c0_i32 = arith.constant 0 : i32
    %c0_i32_0 = arith.constant 0 : i32
    %c0_i32_1 = arith.constant 0 : i32
    return %c0_i32, %c0_i32_0 : i32, i32
  }
  func.func @transform_3(%arg0: i32) -> (i32, i32) {
    %c0_i32 = arith.constant 0 : i32
    %c0_i32_0 = arith.constant 0 : i32
    %c0_i32_1 = arith.constant 0 : i32
    return %c0_i32, %c0_i32_0 : i32, i32
  }
  func.func @transform_4(%arg0: i32) -> (i32, i32) {
    %c0_i32 = arith.constant 0 : i32
    %c0_i32_0 = arith.constant 0 : i32
    %c0_i32_1 = arith.constant 0 : i32
    return %c0_i32, %c0_i32_0 : i32, i32
  }
  func.func @transform_5(%arg0: i32) -> (i32, i32) {
    %c0_i32 = arith.constant 0 : i32
    %c0_i32_0 = arith.constant 0 : i32
    return %arg0, %c0_i32 : i32, i32
  }
}

</mosaic_0001>

<llo_original>
// kernel: mlp_forward.2
$region0: #{mlp_forward.2}
  #allocation0 [shape = 'u32[]', space=smem, size = 0x4, offset = 0x4, fixed_abs, tag = 'smem constant byte address 0x4 - core index']
  #allocation1 [shape = 'u32[144,128]{1,0:T(1,128)}', space=vmem, size = 0x12000, scoped, tag = 'internal scratch']
  %s0 = inlined_call_operand.vmem [shape: f32[16,128], index: 0, kind: input, shape index: {}]
  %s1 = inlined_call_operand.vmem [shape: bf16[128,128], index: 1, kind: input, shape index: {}]
  %s2 = inlined_call_operand.vmem [shape: bf16[16,128], index: 2, kind: output, shape index: {0}]
  %s3 = inlined_call_operand.vmem [shape: f32[1,128], index: 3, kind: output, shape index: {1}]
  %s4 = inlined_call_operand.vmem [shape: f32[1,128], index: 4, kind: output, shape index: {2}]
  %5 = xla_tuple %s2, %s3, %s4
  %s6 = sld [smem:[#allocation0]]
  $region34: #{mlp_forward.2} parent=0
    _
  %s8 = ssub.s32 1, %s6
  %s9 = scalar_select 0, %s8, %s6
  // Predicated region
  $region2: #{mlp_forward.2} parent=0 // pred_check
    _
  $region3: #{mlp_forward.2} parent=0 // pred_check_branch
    %11 = sbr.rel (0) target = $region5
  $region4: #{mlp_forward.2} parent=0 // pred_region
    _
  $region5: #{mlp_forward.2} parent=0 // pred_fallthru
    _
  // Predicated region
  $region6: #{mlp_forward.2} parent=0 // pred_check
    _
  $region7: #{mlp_forward.2} parent=0 // pred_check_branch
    %13 = sbr.rel (0) target = $region9
  $region8: #{mlp_forward.2} parent=0 // pred_region
    _
  $region9: #{mlp_forward.2} parent=0 // pred_fallthru
    _
  %v15 = vld [vmem:[%s0] sm:$0xff]
  %v16 = vld [vmem:[%s0 + $0x8] sm:$0xff]
  %v17 = vpack.c.bf16 %v16, %v15
  %v18 = vld [vmem:[%s1] sm:$0xf]
  %v19 = vld [vmem:[%s1 + $0x4] sm:$0xf]
  %v20 = vld [vmem:[%s1 + $0x8] sm:$0xf]
  %v21 = vld [vmem:[%s1 + $0xc] sm:$0xf]
  %v22 = vld [vmem:[%s1 + $0x10] sm:$0xf]
  %v23 = vld [vmem:[%s1 + $0x14] sm:$0xf]
  %v24 = vld [vmem:[%s1 + $0x18] sm:$0xf]
  %v25 = vld [vmem:[%s1 + $0x1c] sm:$0xf]
  %v26 = vld [vmem:[%s1 + $0x20] sm:$0xf]
  %v27 = vld [vmem:[%s1 + $0x24] sm:$0xf]
  %v28 = vld [vmem:[%s1 + $0x28] sm:$0xf]
  %v29 = vld [vmem:[%s1 + $0x2c] sm:$0xf]
  %v30 = vld [vmem:[%s1 + $0x30] sm:$0xf]
  %v31 = vld [vmem:[%s1 + $0x34] sm:$0xf]
  %v32 = vld [vmem:[%s1 + $0x38] sm:$0xf]
  %v33 = vld [vmem:[%s1 + $0x3c] sm:$0xf]
  %v50 = vunpack.c.l.b16 %v18
  %v51 = vunpack.c.l.b16 %v19
  %v52 = vunpack.c.l.b16 %v20
  %v53 = vunpack.c.l.b16 %v21
  %v54 = vunpack.c.l.b16 %v22
  %v55 = vunpack.c.l.b16 %v23
  %v56 = vunpack.c.l.b16 %v24
  %v57 = vunpack.c.l.b16 %v25
  %v58 = vunpack.c.l.b16 %v26
  %v59 = vunpack.c.l.b16 %v27
  %v60 = vunpack.c.l.b16 %v28
  %v61 = vunpack.c.l.b16 %v29
  %v62 = vunpack.c.l.b16 %v30
  %v63 = vunpack.c.l.b16 %v31
  %v64 = vunpack.c.l.b16 %v32
  %v65 = vunpack.c.l.b16 %v33
  %v66 = vpack.c.b16 %v51, %v50
  %v67 = vpack.c.b16 %v53, %v52
  %v68 = vpack.c.b16 %v55, %v54
  %v69 = vpack.c.b16 %v57, %v56
  %v70 = vpack.c.b16 %v59, %v58
  %v71 = vpack.c.b16 %v61, %v60
  %v72 = vpack.c.b16 %v63, %v62
  %v73 = vpack.c.b16 %v65, %v64
  %82 = vmatprep.subr.bf16.mxu0 0
  %83 = vmatpush1.bf16.msra.mxu0 %v73
  %84 = vmatprep.subr.bf16.mxu0 0
  %85 = vmatpush1.bf16.msra.mxu0 %v72
  %86 = vmatprep.subr.bf16.mxu0 0
  %87 = vmatpush1.bf16.msra.mxu0 %v71
  %88 = vmatprep.subr.bf16.mxu0 0
  %89 = vmatpush1.bf16.msra.mxu0 %v70
  %90 = vmatprep.subr.bf16.mxu0 0
  %91 = vmatpush1.bf16.msra.mxu0 %v69
  %92 = vmatprep.subr.bf16.mxu0 0
  %93 = vmatpush1.bf16.msra.mxu0 %v68
  %94 = vmatprep.subr.bf16.mxu0 0
  %95 = vmatpush1.bf16.msra.mxu0 %v67
  %96 = vmatprep.subr.bf16.mxu0 0
  %97 = vmatpush1.bf16.msra.mxu0 %v66
  %98 = vmatprep.subr.bf16.mxu0 0
  %99 = vmatpush2.bf16.msra.mxu0 0
  %100 = vmatprep.subr.bf16.mxu0 0
  %101 = vmatpush2.bf16.msra.mxu0 0
  %102 = vmatprep.subr.bf16.mxu0 0
  %103 = vmatpush2.bf16.msra.mxu0 0
  %104 = vmatprep.subr.bf16.mxu0 0
  %105 = vmatpush2.bf16.msra.mxu0 0
  %106 = vmatprep.subr.bf16.mxu0 0
  %107 = vmatpush2.bf16.msra.mxu0 0
  %108 = vmatprep.subr.bf16.mxu0 0
  %109 = vmatpush2.bf16.msra.mxu0 0
  %110 = vmatprep.subr.bf16.mxu0 0
  %111 = vmatpush2.bf16.msra.mxu0 0
  %112 = vmatprep.subr.bf16.mxu0 0
  %113 = vmatpush2.bf16.msra.mxu0 0
  %114 = vmatprep.mubr.bf16.mxu0 0
  %115 = vmatmul.mubr.bf16.gmra.mxu0 %v17
  %v116 = vpop.f32.mrf.mxu0
  %v117 = vadd.f32 0.0, %v116
  %v118 = vpop.f32.mrf.mxu0
  %v119 = vpop.f32.mrf.mxu0
  %v120 = vadd.f32 0.0, %v119
  %v121 = vpop.f32.mrf.mxu0
  %122 = vdwg.mxu0
  %v123 = vadd.f32 %v117, %v120
  %v124 = vrot.slane %v123, 4
  %v125 = vadd.f32 %v123, %v124
  %v126 = vrot.slane %v125, 2
  %v127 = vadd.f32 %v125, %v126
  %v128 = vrot.slane %v127, 1
  %v129 = vadd.f32 %v127, %v128
  %130 = vst [vmem:[%s3] sm:$0x1] %v129
  %v131 = vmul.f32 %v117, %v117
  %v132 = vmul.f32 %v120, %v120
  %v133 = vadd.f32 %v131, %v132
  %v134 = vrot.slane %v133, 4
  %v135 = vadd.f32 %v133, %v134
  %v136 = vrot.slane %v135, 2
  %v137 = vadd.f32 %v135, %v136
  %v138 = vrot.slane %v137, 1
  %v139 = vadd.f32 %v137, %v138
  %140 = vst [vmem:[%s4] sm:$0x1] %v139
  %v141 = vpack.c.bf16 %v120, %v117
  %v143 = vunpack.c.l.b16 %v141
  %v144 = vunpack.c.h.b16 %v141
  %v145 = vpack.c.b16 %v143, %v143
  %v146 = vpack.c.b16 %v144, %v144
  %149 = vst [vmem:[%s2] sm:$0xf] %v145
  %150 = vst [vmem:[%s2 + $0x4] sm:$0xf] %v146
  // Predicated region
  $region10: #{mlp_forward.2} parent=0 // pred_check
    _
  $region11: #{mlp_forward.2} parent=0 // pred_check_branch
    %152 = sbr.rel (0) target = $region13
  $region12: #{mlp_forward.2} parent=0 // pred_region
    _
  $region13: #{mlp_forward.2} parent=0 // pred_fallthru
    _
  // Predicated region
  $region14: #{mlp_forward.2} parent=0 // pred_check
    _
  $region15: #{mlp_forward.2} parent=0 // pred_check_branch
    %154 = sbr.rel (0) target = $region17
  $region16: #{mlp_forward.2} parent=0 // pred_region
    _
  $region17: #{mlp_forward.2} parent=0 // pred_fallthru
    _
  // Predicated region
  $region18: #{mlp_forward.2} parent=0 // pred_check
    _
  $region19: #{mlp_forward.2} parent=0 // pred_check_branch
    %156 = sbr.rel (0) target = $region21
  $region20: #{mlp_forward.2} parent=0 // pred_region
    _
  $region21: #{mlp_forward.2} parent=0 // pred_fallthru
    _
  // Predicated region
  $region22: #{mlp_forward.2} parent=0 // pred_check
    _
  $region23: #{mlp_forward.2} parent=0 // pred_check_branch
    %158 = sbr.rel (0) target = $region25
  $region24: #{mlp_forward.2} parent=0 // pred_region
    _
  $region25: #{mlp_forward.2} parent=0 // pred_fallthru
    _
  // Predicated region
  $region26: #{mlp_forward.2} parent=0 // pred_check
    _
  $region27: #{mlp_forward.2} parent=0 // pred_check_branch
    %160 = sbr.rel (0) target = $region29
  $region28: #{mlp_forward.2} parent=0 // pred_region
    _
  $region29: #{mlp_forward.2} parent=0 // pred_fallthru
    _
  // Predicated region
  $region30: #{mlp_forward.2} parent=0 // pred_check
    _
  $region31: #{mlp_forward.2} parent=0 // pred_check_branch
    %162 = sbr.rel (0) target = $region33
  $region32: #{mlp_forward.2} parent=0 // pred_region
    _
  $region33: #{mlp_forward.2} parent=0 // pred_fallthru
    _

// kernel: mlp_forward.3
$region0: #{mlp_forward.3}
  #allocation0 [shape = 'u32[]', space=smem, size = 0x4, offset = 0x4, fixed_abs, tag = 'smem constant byte address 0x4 - core index']
  #allocation1 [shape = 'u32[144,128]{1,0:T(1,128)}', space=vmem, size = 0x12000, scoped, tag = 'internal scratch']
  %s0 = inlined_call_operand.vmem [shape: bf16[16,128], index: 0, kind: input, shape index: {}]
  %s1 = inlined_call_operand.vmem [shape: f32[1,128], index: 1, kind: input, shape index: {}]
  %s2 = inlined_call_operand.vmem [shape: f32[1,128], index: 2, kind: input, shape index: {}]
  %s3 = inlined_call_operand.vmem [shape: bf16[128,128], index: 3, kind: input, shape index: {}]
  %s4 = inlined_call_operand.vmem [shape: f32[1,128], index: 4, kind: input, shape index: {}]
  %s5 = inlined_call_operand.vmem [shape: f32[16,128], index: 5, kind: output, shape index: {}]
  %s6 = sld [smem:[#allocation0]]
  $region30: #{mlp_forward.3} parent=0
    _
  %s8 = ssub.s32 1, %s6
  %s9 = scalar_select 0, %s8, %s6
  // Predicated region
  $region2: #{mlp_forward.3} parent=0 // pred_check
    _
  $region3: #{mlp_forward.3} parent=0 // pred_check_branch
    %11 = sbr.rel (0) target = $region5
  $region4: #{mlp_forward.3} parent=0 // pred_region
    _
  $region5: #{mlp_forward.3} parent=0 // pred_fallthru
    _
  // Predicated region
  $region6: #{mlp_forward.3} parent=0 // pred_check
    _
  $region7: #{mlp_forward.3} parent=0 // pred_check_branch
    %13 = sbr.rel (0) target = $region9
  $region8: #{mlp_forward.3} parent=0 // pred_region
    _
  $region9: #{mlp_forward.3} parent=0 // pred_fallthru
    _
  // Predicated region
  $region10: #{mlp_forward.3} parent=0 // pred_check
    _
  $region11: #{mlp_forward.3} parent=0 // pred_check_branch
    %15 = sbr.rel (0) target = $region13
  $region12: #{mlp_forward.3} parent=0 // pred_region
    _
  $region13: #{mlp_forward.3} parent=0 // pred_fallthru
    _
  // Predicated region
  $region14: #{mlp_forward.3} parent=0 // pred_check
    _
  $region15: #{mlp_forward.3} parent=0 // pred_check_branch
    %17 = sbr.rel (0) target = $region17
  $region16: #{mlp_forward.3} parent=0 // pred_region
    _
  $region17: #{mlp_forward.3} parent=0 // pred_fallthru
    _
  // Predicated region
  $region18: #{mlp_forward.3} parent=0 // pred_check
    _
  $region19: #{mlp_forward.3} parent=0 // pred_check_branch
    %19 = sbr.rel (0) target = $region21
  $region20: #{mlp_forward.3} parent=0 // pred_region
    _
  $region21: #{mlp_forward.3} parent=0 // pred_fallthru
    _
  %v21 = vld [vmem:[%s0] sm:$0xf]
  %v22 = vld [vmem:[%s0 + $0x4] sm:$0xf]
  %v23 = vunpack.c.l.bf16 %v21
  %v24 = vunpack.c.l.bf16 %v22
  %v25 = vld [vmem:[%s1] sm:$0x1]
  %v27 = vlaneseq
  %v28 = vshrl.u32 %v27, 7
  %v29 = vsub.s32 0, %v28
  %v30 = vrot.slane %v25, %v29
  %v32 = vmul.f32 %v23, %v30
  %v33 = vmul.f32 %v24, %v30
  %v34 = vld [vmem:[%s2] sm:$0x1]
  %v36 = vlaneseq
  %v37 = vshrl.u32 %v36, 7
  %v38 = vsub.s32 0, %v37
  %v39 = vrot.slane %v34, %v38
  %v41 = vadd.f32 %v32, %v39
  %v42 = vadd.f32 %v33, %v39
  %v43 = vmax.f32 %v41, 0.0
  %v44 = vmax.f32 %v42, 0.0
  %v45 = vpack.c.bf16 %v44, %v43
  %v46 = vld [vmem:[%s3] sm:$0xf]
  %v47 = vld [vmem:[%s3 + $0x4] sm:$0xf]
  %v48 = vld [vmem:[%s3 + $0x8] sm:$0xf]
  %v49 = vld [vmem:[%s3 + $0xc] sm:$0xf]
  %v50 = vld [vmem:[%s3 + $0x10] sm:$0xf]
  %v51 = vld [vmem:[%s3 + $0x14] sm:$0xf]
  %v52 = vld [vmem:[%s3 + $0x18] sm:$0xf]
  %v53 = vld [vmem:[%s3 + $0x1c] sm:$0xf]
  %v54 = vld [vmem:[%s3 + $0x20] sm:$0xf]
  %v55 = vld [vmem:[%s3 + $0x24] sm:$0xf]
  %v56 = vld [vmem:[%s3 + $0x28] sm:$0xf]
  %v57 = vld [vmem:[%s3 + $0x2c] sm:$0xf]
  %v58 = vld [vmem:[%s3 + $0x30] sm:$0xf]
  %v59 = vld [vmem:[%s3 + $0x34] sm:$0xf]
  %v60 = vld [vmem:[%s3 + $0x38] sm:$0xf]
  %v61 = vld [vmem:[%s3 + $0x3c] sm:$0xf]
  %v62 = vld [vmem:[%s4] sm:$0x1]
  %v64 = vlaneseq
  %v65 = vshrl.u32 %v64, 7
  %v66 = vsub.s32 0, %v65
  %v67 = vrot.slane %v62, %v66
  %v85 = vunpack.c.l.b16 %v46
  %v86 = vunpack.c.l.b16 %v47
  %v87 = vunpack.c.l.b16 %v48
  %v88 = vunpack.c.l.b16 %v49
  %v89 = vunpack.c.l.b16 %v50
  %v90 = vunpack.c.l.b16 %v51
  %v91 = vunpack.c.l.b16 %v52
  %v92 = vunpack.c.l.b16 %v53
  %v93 = vunpack.c.l.b16 %v54
  %v94 = vunpack.c.l.b16 %v55
  %v95 = vunpack.c.l.b16 %v56
  %v96 = vunpack.c.l.b16 %v57
  %v97 = vunpack.c.l.b16 %v58
  %v98 = vunpack.c.l.b16 %v59
  %v99 = vunpack.c.l.b16 %v60
  %v100 = vunpack.c.l.b16 %v61
  %v101 = vpack.c.b16 %v86, %v85
  %v102 = vpack.c.b16 %v88, %v87
  %v103 = vpack.c.b16 %v90, %v89
  %v104 = vpack.c.b16 %v92, %v91
  %v105 = vpack.c.b16 %v94, %v93
  %v106 = vpack.c.b16 %v96, %v95
  %v107 = vpack.c.b16 %v98, %v97
  %v108 = vpack.c.b16 %v100, %v99
  %117 = vmatprep.subr.bf16.mxu0 0
  %118 = vmatpush1.bf16.msra.mxu0 %v108
  %119 = vmatprep.subr.bf16.mxu0 0
  %120 = vmatpush1.bf16.msra.mxu0 %v107
  %121 = vmatprep.subr.bf16.mxu0 0
  %122 = vmatpush1.bf16.msra.mxu0 %v106
  %123 = vmatprep.subr.bf16.mxu0 0
  %124 = vmatpush1.bf16.msra.mxu0 %v105
  %125 = vmatprep.subr.bf16.mxu0 0
  %126 = vmatpush1.bf16.msra.mxu0 %v104
  %127 = vmatprep.subr.bf16.mxu0 0
  %128 = vmatpush1.bf16.msra.mxu0 %v103
  %129 = vmatprep.subr.bf16.mxu0 0
  %130 = vmatpush1.bf16.msra.mxu0 %v102
  %131 = vmatprep.subr.bf16.mxu0 0
  %132 = vmatpush1.bf16.msra.mxu0 %v101
  %133 = vmatprep.subr.bf16.mxu0 0
  %134 = vmatpush2.bf16.msra.mxu0 0
  %135 = vmatprep.subr.bf16.mxu0 0
  %136 = vmatpush2.bf16.msra.mxu0 0
  %137 = vmatprep.subr.bf16.mxu0 0
  %138 = vmatpush2.bf16.msra.mxu0 0
  %139 = vmatprep.subr.bf16.mxu0 0
  %140 = vmatpush2.bf16.msra.mxu0 0
  %141 = vmatprep.subr.bf16.mxu0 0
  %142 = vmatpush2.bf16.msra.mxu0 0
  %143 = vmatprep.subr.bf16.mxu0 0
  %144 = vmatpush2.bf16.msra.mxu0 0
  %145 = vmatprep.subr.bf16.mxu0 0
  %146 = vmatpush2.bf16.msra.mxu0 0
  %147 = vmatprep.subr.bf16.mxu0 0
  %148 = vmatpush2.bf16.msra.mxu0 0
  %149 = vmatprep.mubr.bf16.mxu0 0
  %150 = vmatmul.mubr.bf16.gmra.mxu0 %v45
  %v151 = vpop.f32.mrf.mxu0
  %v152 = vadd.f32 %v67, %v151
  %v153 = vpop.f32.mrf.mxu0
  %v154 = vpop.f32.mrf.mxu0
  %v155 = vadd.f32 %v67, %v154
  %v156 = vpop.f32.mrf.mxu0
  %157 = vdwg.mxu0
  %158 = vst [vmem:[%s5] sm:$0xff] %v152
  %159 = vst [vmem:[%s5 + $0x8] sm:$0xff] %v155
  // Predicated region
  $region22: #{mlp_forward.3} parent=0 // pred_check
    _
  $region23: #{mlp_forward.3} parent=0 // pred_check_branch
    %161 = sbr.rel (0) target = $region25
  $region24: #{mlp_forward.3} parent=0 // pred_region
    _
  $region25: #{mlp_forward.3} parent=0 // pred_fallthru
    _
  // Predicated region
  $region26: #{mlp_forward.3} parent=0 // pred_check
    _
  $region27: #{mlp_forward.3} parent=0 // pred_check_branch
    %163 = sbr.rel (0) target = $region29
  $region28: #{mlp_forward.3} parent=0 // pred_region
    _
  $region29: #{mlp_forward.3} parent=0 // pred_fallthru
    _

// kernel: mlp_forward.2
$region0: #{mlp_forward.2}
  #allocation0 [shape = 'u32[]', space=smem, size = 0x4, offset = 0x4, fixed_abs, tag = 'smem constant byte address 0x4 - core index']
  #allocation1 [shape = 'u32[144,128]{1,0:T(1,128)}', space=vmem, size = 0x12000, scoped, tag = 'internal scratch']
  %s0 = inlined_call_operand.vmem [shape: f32[16,128], index: 0, kind: input, shape index: {}]
  %s1 = inlined_call_operand.vmem [shape: bf16[128,128], index: 1, kind: input, shape index: {}]
  %s2 = inlined_call_operand.vmem [shape: bf16[16,128], index: 2, kind: output, shape index: {0}]
  %s3 = inlined_call_operand.vmem [shape: f32[1,128], index: 3, kind: output, shape index: {1}]
  %s4 = inlined_call_operand.vmem [shape: f32[1,128], index: 4, kind: output, shape index: {2}]
  %5 = xla_tuple %s2, %s3, %s4
  %s6 = sld [smem:[#allocation0]]
  $region34: #{mlp_forward.2} parent=0
    _
  %s8 = ssub.s32 1, %s6
  %s9 = scalar_select 0, %s8, %s6
  // Predicated region
  $region2: #{mlp_forward.2} parent=0 // pred_check
    _
  $region3: #{mlp_forward.2} parent=0 // pred_check_branch
    %11 = sbr.rel (0) target = $region5
  $region4: #{mlp_forward.2} parent=0 // pred_region
    _
  $region5: #{mlp_forward.2} parent=0 // pred_fallthru
    _
  // Predicated region
  $region6: #{mlp_forward.2} parent=0 // pred_check
    _
  $region7: #{mlp_forward.2} parent=0 // pred_check_branch
    %13 = sbr.rel (0) target = $region9
  $region8: #{mlp_forward.2} parent=0 // pred_region
    _
  $region9: #{mlp_forward.2} parent=0 // pred_fallthru
    _
  %v15 = vld [vmem:[%s0] sm:$0xff]
  %v16 = vld [vmem:[%s0 + $0x8] sm:$0xff]
  %v17 = vpack.c.bf16 %v16, %v15
  %v18 = vld [vmem:[%s1] sm:$0xf]
  %v19 = vld [vmem:[%s1 + $0x4] sm:$0xf]
  %v20 = vld [vmem:[%s1 + $0x8] sm:$0xf]
  %v21 = vld [vmem:[%s1 + $0xc] sm:$0xf]
  %v22 = vld [vmem:[%s1 + $0x10] sm:$0xf]
  %v23 = vld [vmem:[%s1 + $0x14] sm:$0xf]
  %v24 = vld [vmem:[%s1 + $0x18] sm:$0xf]
  %v25 = vld [vmem:[%s1 + $0x1c] sm:$0xf]
  %v26 = vld [vmem:[%s1 + $0x20] sm:$0xf]
  %v27 = vld [vmem:[%s1 + $0x24] sm:$0xf]
  %v28 = vld [vmem:[%s1 + $0x28] sm:$0xf]
  %v29 = vld [vmem:[%s1 + $0x2c] sm:$0xf]
  %v30 = vld [vmem:[%s1 + $0x30] sm:$0xf]
  %v31 = vld [vmem:[%s1 + $0x34] sm:$0xf]
  %v32 = vld [vmem:[%s1 + $0x38] sm:$0xf]
  %v33 = vld [vmem:[%s1 + $0x3c] sm:$0xf]
  %v50 = vunpack.c.l.b16 %v18
  %v51 = vunpack.c.l.b16 %v19
  %v52 = vunpack.c.l.b16 %v20
  %v53 = vunpack.c.l.b16 %v21
  %v54 = vunpack.c.l.b16 %v22
  %v55 = vunpack.c.l.b16 %v23
  %v56 = vunpack.c.l.b16 %v24
  %v57 = vunpack.c.l.b16 %v25
  %v58 = vunpack.c.l.b16 %v26
  %v59 = vunpack.c.l.b16 %v27
  %v60 = vunpack.c.l.b16 %v28
  %v61 = vunpack.c.l.b16 %v29
  %v62 = vunpack.c.l.b16 %v30
  %v63 = vunpack.c.l.b16 %v31
  %v64 = vunpack.c.l.b16 %v32
  %v65 = vunpack.c.l.b16 %v33
  %v66 = vpack.c.b16 %v51, %v50
  %v67 = vpack.c.b16 %v53, %v52
  %v68 = vpack.c.b16 %v55, %v54
  %v69 = vpack.c.b16 %v57, %v56
  %v70 = vpack.c.b16 %v59, %v58
  %v71 = vpack.c.b16 %v61, %v60
  %v72 = vpack.c.b16 %v63, %v62
  %v73 = vpack.c.b16 %v65, %v64
  %82 = vmatprep.subr.bf16.mxu0 0
  %83 = vmatpush1.bf16.msra.mxu0 %v73
  %84 = vmatprep.subr.bf16.mxu0 0
  %85 = vmatpush1.bf16.msra.mxu0 %v72
  %86 = vmatprep.subr.bf16.mxu0 0
  %87 = vmatpush1.bf16.msra.mxu0 %v71
  %88 = vmatprep.subr.bf16.mxu0 0
  %89 = vmatpush1.bf16.msra.mxu0 %v70
  %90 = vmatprep.subr.bf16.mxu0 0
  %91 = vmatpush1.bf16.msra.mxu0 %v69
  %92 = vmatprep.subr.bf16.mxu0 0
  %93 = vmatpush1.bf16.msra.mxu0 %v68
  %94 = vmatprep.subr.bf16.mxu0 0
  %95 = vmatpush1.bf16.msra.mxu0 %v67
  %96 = vmatprep.subr.bf16.mxu0 0
  %97 = vmatpush1.bf16.msra.mxu0 %v66
  %98 = vmatprep.subr.bf16.mxu0 0
  %99 = vmatpush2.bf16.msra.mxu0 0
  %100 = vmatprep.subr.bf16.mxu0 0
  %101 = vmatpush2.bf16.msra.mxu0 0
  %102 = vmatprep.subr.bf16.mxu0 0
  %103 = vmatpush2.bf16.msra.mxu0 0
  %104 = vmatprep.subr.bf16.mxu0 0
  %105 = vmatpush2.bf16.msra.mxu0 0
  %106 = vmatprep.subr.bf16.mxu0 0
  %107 = vmatpush2.bf16.msra.mxu0 0
  %108 = vmatprep.subr.bf16.mxu0 0
  %109 = vmatpush2.bf16.msra.mxu0 0
  %110 = vmatprep.subr.bf16.mxu0 0
  %111 = vmatpush2.bf16.msra.mxu0 0
  %112 = vmatprep.subr.bf16.mxu0 0
  %113 = vmatpush2.bf16.msra.mxu0 0
  %114 = vmatprep.mubr.bf16.mxu0 0
  %115 = vmatmul.mubr.bf16.gmra.mxu0 %v17
  %v116 = vpop.f32.mrf.mxu0
  %v117 = vadd.f32 0.0, %v116
  %v118 = vpop.f32.mrf.mxu0
  %v119 = vpop.f32.mrf.mxu0
  %v120 = vadd.f32 0.0, %v119
  %v121 = vpop.f32.mrf.mxu0
  %122 = vdwg.mxu0
  %v123 = vadd.f32 %v117, %v120
  %v124 = vrot.slane %v123, 4
  %v125 = vadd.f32 %v123, %v124
  %v126 = vrot.slane %v125, 2
  %v127 = vadd.f32 %v125, %v126
  %v128 = vrot.slane %v127, 1
  %v129 = vadd.f32 %v127, %v128
  %130 = vst [vmem:[%s3] sm:$0x1] %v129
  %v131 = vmul.f32 %v117, %v117
  %v132 = vmul.f32 %v120, %v120
  %v133 = vadd.f32 %v131, %v132
  %v134 = vrot.slane %v133, 4
  %v135 = vadd.f32 %v133, %v134
  %v136 = vrot.slane %v135, 2
  %v137 = vadd.f32 %v135, %v136
  %v138 = vrot.slane %v137, 1
  %v139 = vadd.f32 %v137, %v138
  %140 = vst [vmem:[%s4] sm:$0x1] %v139
  %v141 = vpack.c.bf16 %v120, %v117
  %v143 = vunpack.c.l.b16 %v141
  %v144 = vunpack.c.h.b16 %v141
  %v145 = vpack.c.b16 %v143, %v143
  %v146 = vpack.c.b16 %v144, %v144
  %149 = vst [vmem:[%s2] sm:$0xf] %v145
  %150 = vst [vmem:[%s2 + $0x4] sm:$0xf] %v146
  // Predicated region
  $region10: #{mlp_forward.2} parent=0 // pred_check
    _
  $region11: #{mlp_forward.2} parent=0 // pred_check_branch
    %152 = sbr.rel (0) target = $region13
  $region12: #{mlp_forward.2} parent=0 // pred_region
    _
  $region13: #{mlp_forward.2} parent=0 // pred_fallthru
    _
  // Predicated region
  $region14: #{mlp_forward.2} parent=0 // pred_check
    _
  $region15: #{mlp_forward.2} parent=0 // pred_check_branch
    %154 = sbr.rel (0) target = $region17
  $region16: #{mlp_forward.2} parent=0 // pred_region
    _
  $region17: #{mlp_forward.2} parent=0 // pred_fallthru
    _
  // Predicated region
  $region18: #{mlp_forward.2} parent=0 // pred_check
    _
  $region19: #{mlp_forward.2} parent=0 // pred_check_branch
    %156 = sbr.rel (0) target = $region21
  $region20: #{mlp_forward.2} parent=0 // pred_region
    _
  $region21: #{mlp_forward.2} parent=0 // pred_fallthru
    _
  // Predicated region
  $region22: #{mlp_forward.2} parent=0 // pred_check
    _
  $region23: #{mlp_forward.2} parent=0 // pred_check_branch
    %158 = sbr.rel (0) target = $region25
  $region24: #{mlp_forward.2} parent=0 // pred_region
    _
  $region25: #{mlp_forward.2} parent=0 // pred_fallthru
    _
  // Predicated region
  $region26: #{mlp_forward.2} parent=0 // pred_check
    _
  $region27: #{mlp_forward.2} parent=0 // pred_check_branch
    %160 = sbr.rel (0) target = $region29
  $region28: #{mlp_forward.2} parent=0 // pred_region
    _
  $region29: #{mlp_forward.2} parent=0 // pred_fallthru
    _
  // Predicated region
  $region30: #{mlp_forward.2} parent=0 // pred_check
    _
  $region31: #{mlp_forward.2} parent=0 // pred_check_branch
    %162 = sbr.rel (0) target = $region33
  $region32: #{mlp_forward.2} parent=0 // pred_region
    _
  $region33: #{mlp_forward.2} parent=0 // pred_fallthru
    _

// kernel: mlp_forward.3
$region0: #{mlp_forward.3}
  #allocation0 [shape = 'u32[]', space=smem, size = 0x4, offset = 0x4, fixed_abs, tag = 'smem constant byte address 0x4 - core index']
  #allocation1 [shape = 'u32[144,128]{1,0:T(1,128)}', space=vmem, size = 0x12000, scoped, tag = 'internal scratch']
  %s0 = inlined_call_operand.vmem [shape: bf16[16,128], index: 0, kind: input, shape index: {}]
  %s1 = inlined_call_operand.vmem [shape: f32[1,128], index: 1, kind: input, shape index: {}]
  %s2 = inlined_call_operand.vmem [shape: f32[1,128], index: 2, kind: input, shape index: {}]
  %s3 = inlined_call_operand.vmem [shape: bf16[128,128], index: 3, kind: input, shape index: {}]
  %s4 = inlined_call_operand.vmem [shape: f32[1,128], index: 4, kind: input, shape index: {}]
  %s5 = inlined_call_operand.vmem [shape: f32[16,128], index: 5, kind: output, shape index: {}]
  %s6 = sld [smem:[#allocation0]]
  $region30: #{mlp_forward.3} parent=0
    _
  %s8 = ssub.s32 1, %s6
  %s9 = scalar_select 0, %s8, %s6
  // Predicated region
  $region2: #{mlp_forward.3} parent=0 // pred_check
    _
  $region3: #{mlp_forward.3} parent=0 // pred_check_branch
    %11 = sbr.rel (0) target = $region5
  $region4: #{mlp_forward.3} parent=0 // pred_region
    _
  $region5: #{mlp_forward.3} parent=0 // pred_fallthru
    _
  // Predicated region
  $region6: #{mlp_forward.3} parent=0 // pred_check
    _
  $region7: #{mlp_forward.3} parent=0 // pred_check_branch
    %13 = sbr.rel (0) target = $region9
  $region8: #{mlp_forward.3} parent=0 // pred_region
    _
  $region9: #{mlp_forward.3} parent=0 // pred_fallthru
    _
  // Predicated region
  $region10: #{mlp_forward.3} parent=0 // pred_check
    _
  $region11: #{mlp_forward.3} parent=0 // pred_check_branch
    %15 = sbr.rel (0) target = $region13
  $region12: #{mlp_forward.3} parent=0 // pred_region
    _
  $region13: #{mlp_forward.3} parent=0 // pred_fallthru
    _
  // Predicated region
  $region14: #{mlp_forward.3} parent=0 // pred_check
    _
  $region15: #{mlp_forward.3} parent=0 // pred_check_branch
    %17 = sbr.rel (0) target = $region17
  $region16: #{mlp_forward.3} parent=0 // pred_region
    _
  $region17: #{mlp_forward.3} parent=0 // pred_fallthru
    _
  // Predicated region
  $region18: #{mlp_forward.3} parent=0 // pred_check
    _
  $region19: #{mlp_forward.3} parent=0 // pred_check_branch
    %19 = sbr.rel (0) target = $region21
  $region20: #{mlp_forward.3} parent=0 // pred_region
    _
  $region21: #{mlp_forward.3} parent=0 // pred_fallthru
    _
  %v21 = vld [vmem:[%s0] sm:$0xf]
  %v22 = vld [vmem:[%s0 + $0x4] sm:$0xf]
  %v23 = vunpack.c.l.bf16 %v21
  %v24 = vunpack.c.l.bf16 %v22
  %v25 = vld [vmem:[%s1] sm:$0x1]
  %v27 = vlaneseq
  %v28 = vshrl.u32 %v27, 7
  %v29 = vsub.s32 0, %v28
  %v30 = vrot.slane %v25, %v29
  %v32 = vmul.f32 %v23, %v30
  %v33 = vmul.f32 %v24, %v30
  %v34 = vld [vmem:[%s2] sm:$0x1]
  %v36 = vlaneseq
  %v37 = vshrl.u32 %v36, 7
  %v38 = vsub.s32 0, %v37
  %v39 = vrot.slane %v34, %v38
  %v41 = vadd.f32 %v32, %v39
  %v42 = vadd.f32 %v33, %v39
  %v43 = vmax.f32 %v41, 0.0
  %v44 = vmax.f32 %v42, 0.0
  %v45 = vpack.c.bf16 %v44, %v43
  %v46 = vld [vmem:[%s3] sm:$0xf]
  %v47 = vld [vmem:[%s3 + $0x4] sm:$0xf]
  %v48 = vld [vmem:[%s3 + $0x8] sm:$0xf]
  %v49 = vld [vmem:[%s3 + $0xc] sm:$0xf]
  %v50 = vld [vmem:[%s3 + $0x10] sm:$0xf]
  %v51 = vld [vmem:[%s3 + $0x14] sm:$0xf]
  %v52 = vld [vmem:[%s3 + $0x18] sm:$0xf]
  %v53 = vld [vmem:[%s3 + $0x1c] sm:$0xf]
  %v54 = vld [vmem:[%s3 + $0x20] sm:$0xf]
  %v55 = vld [vmem:[%s3 + $0x24] sm:$0xf]
  %v56 = vld [vmem:[%s3 + $0x28] sm:$0xf]
  %v57 = vld [vmem:[%s3 + $0x2c] sm:$0xf]
  %v58 = vld [vmem:[%s3 + $0x30] sm:$0xf]
  %v59 = vld [vmem:[%s3 + $0x34] sm:$0xf]
  %v60 = vld [vmem:[%s3 + $0x38] sm:$0xf]
  %v61 = vld [vmem:[%s3 + $0x3c] sm:$0xf]
  %v62 = vld [vmem:[%s4] sm:$0x1]
  %v64 = vlaneseq
  %v65 = vshrl.u32 %v64, 7
  %v66 = vsub.s32 0, %v65
  %v67 = vrot.slane %v62, %v66
  %v85 = vunpack.c.l.b16 %v46
  %v86 = vunpack.c.l.b16 %v47
  %v87 = vunpack.c.l.b16 %v48
  %v88 = vunpack.c.l.b16 %v49
  %v89 = vunpack.c.l.b16 %v50
  %v90 = vunpack.c.l.b16 %v51
  %v91 = vunpack.c.l.b16 %v52
  %v92 = vunpack.c.l.b16 %v53
  %v93 = vunpack.c.l.b16 %v54
  %v94 = vunpack.c.l.b16 %v55
  %v95 = vunpack.c.l.b16 %v56
  %v96 = vunpack.c.l.b16 %v57
  %v97 = vunpack.c.l.b16 %v58
  %v98 = vunpack.c.l.b16 %v59
  %v99 = vunpack.c.l.b16 %v60
  %v100 = vunpack.c.l.b16 %v61
  %v101 = vpack.c.b16 %v86, %v85
  %v102 = vpack.c.b16 %v88, %v87
  %v103 = vpack.c.b16 %v90, %v89
  %v104 = vpack.c.b16 %v92, %v91
  %v105 = vpack.c.b16 %v94, %v93
  %v106 = vpack.c.b16 %v96, %v95
  %v107 = vpack.c.b16 %v98, %v97
  %v108 = vpack.c.b16 %v100, %v99
  %117 = vmatprep.subr.bf16.mxu0 0
  %118 = vmatpush1.bf16.msra.mxu0 %v108
  %119 = vmatprep.subr.bf16.mxu0 0
  %120 = vmatpush1.bf16.msra.mxu0 %v107
  %121 = vmatprep.subr.bf16.mxu0 0
  %122 = vmatpush1.bf16.msra.mxu0 %v106
  %123 = vmatprep.subr.bf16.mxu0 0
  %124 = vmatpush1.bf16.msra.mxu0 %v105
  %125 = vmatprep.subr.bf16.mxu0 0
  %126 = vmatpush1.bf16.msra.mxu0 %v104
  %127 = vmatprep.subr.bf16.mxu0 0
  %128 = vmatpush1.bf16.msra.mxu0 %v103
  %129 = vmatprep.subr.bf16.mxu0 0
  %130 = vmatpush1.bf16.msra.mxu0 %v102
  %131 = vmatprep.subr.bf16.mxu0 0
  %132 = vmatpush1.bf16.msra.mxu0 %v101
  %133 = vmatprep.subr.bf16.mxu0 0
  %134 = vmatpush2.bf16.msra.mxu0 0
  %135 = vmatprep.subr.bf16.mxu0 0
  %136 = vmatpush2.bf16.msra.mxu0 0
  %137 = vmatprep.subr.bf16.mxu0 0
  %138 = vmatpush2.bf16.msra.mxu0 0
  %139 = vmatprep.subr.bf16.mxu0 0
  %140 = vmatpush2.bf16.msra.mxu0 0
  %141 = vmatprep.subr.bf16.mxu0 0
  %142 = vmatpush2.bf16.msra.mxu0 0
  %143 = vmatprep.subr.bf16.mxu0 0
  %144 = vmatpush2.bf16.msra.mxu0 0
  %145 = vmatprep.subr.bf16.mxu0 0
  %146 = vmatpush2.bf16.msra.mxu0 0
  %147 = vmatprep.subr.bf16.mxu0 0
  %148 = vmatpush2.bf16.msra.mxu0 0
  %149 = vmatprep.mubr.bf16.mxu0 0
  %150 = vmatmul.mubr.bf16.gmra.mxu0 %v45
  %v151 = vpop.f32.mrf.mxu0
  %v152 = vadd.f32 %v67, %v151
  %v153 = vpop.f32.mrf.mxu0
  %v154 = vpop.f32.mrf.mxu0
  %v155 = vadd.f32 %v67, %v154
  %v156 = vpop.f32.mrf.mxu0
  %157 = vdwg.mxu0
  %158 = vst [vmem:[%s5] sm:$0xff] %v152
  %159 = vst [vmem:[%s5 + $0x8] sm:$0xff] %v155
  // Predicated region
  $region22: #{mlp_forward.3} parent=0 // pred_check
    _
  $region23: #{mlp_forward.3} parent=0 // pred_check_branch
    %161 = sbr.rel (0) target = $region25
  $region24: #{mlp_forward.3} parent=0 // pred_region
    _
  $region25: #{mlp_forward.3} parent=0 // pred_fallthru
    _
  // Predicated region
  $region26: #{mlp_forward.3} parent=0 // pred_check
    _
  $region27: #{mlp_forward.3} parent=0 // pred_check_branch
    %163 = sbr.rel (0) target = $region29
  $region28: #{mlp_forward.3} parent=0 // pred_region
    _
  $region29: #{mlp_forward.3} parent=0 // pred_fallthru
    _

</llo_original>
